<compile_context>
chip_gen: v7x
topology: tpu7x:2x2x1
jax: 0.10.0
libtpu: 0.0.40
codegen_flags: <defaults>
</compile_context>

<pallas_src>
import jax
import jax.numpy as jnp
from jax import lax
from jax.experimental import pallas as pl
from jax.experimental.pallas import tpu as pltpu

_LANE = 128
_SUBLANE = 8


def _round_up(n, m):
    return ((n + m - 1) // m) * m


def _sigmoid(x):
    # exp goes to the EUP (free slot); exact sigmoid semantics.
    return 1.0 / (1.0 + jnp.exp(-x))


def sae_kernel(x_ref,
               w1_ref, b1_ref,
               w2_ref, b2_ref,
               w3_ref, b3_ref,
               w4_ref, b4_ref,
               o_ref):
    x = x_ref[...].astype(jnp.float32)

    # fc1: w1 is stored (20, nb_movies) so nb_movies sits on the lane axis.
    # Contract x dim 1 with w1 dim 1 (NT matmul) == x @ W1_pt.T
    z1 = lax.dot_general(x, w1_ref[...],
                         dimension_numbers=(((1,), (1,)), ((), ())),
                         preferred_element_type=jnp.float32)
    h1 = _sigmoid(z1 + b1_ref[...])
    h2 = _sigmoid(jnp.dot(h1, w2_ref[...],
                          preferred_element_type=jnp.float32) + b2_ref[...])
    h3 = _sigmoid(jnp.dot(h2, w3_ref[...],
                          preferred_element_type=jnp.float32) + b3_ref[...])
    out = jnp.dot(h3, w4_ref[...],
                  preferred_element_type=jnp.float32) + b4_ref[...]

    o_ref[...] = out.astype(o_ref.dtype)


def _pick_tb(batch, nb_movies, itemsize):
    """Batch-tile rows, derived from VMEM budget / tile-size target / TC split."""
    bytes_per_row = _round_up(nb_movies, _LANE) * itemsize
    # VMEM cap: x + out streams, double-buffered -> 4 live tiles. 32 MiB budget
    # leaves headroom for the resident weights even on v7x (64 MiB physical).
    tb_vmem = max(_SUBLANE,
                  ((32 << 20) // (4 * bytes_per_row)) // _SUBLANE * _SUBLANE)
    # Target >= ~1 MiB per streamed tile (and at least 128 rows) to amortize
    # the per-grid-step overhead and approach the HBM roofline on v5e/v6e.
    tb_target = max(128, _round_up(max(1, (1 << 20) // bytes_per_row), _SUBLANE))
    # Keep >= 2 grid tiles so both v7x TensorCores get work.
    tb_split = _round_up(pl.cdiv(batch, 2), _SUBLANE) if batch > _SUBLANE else _SUBLANE
    return max(_SUBLANE, min(tb_target, tb_vmem, tb_split, 1024))


def sae_forward(x, params, *, tb=None):
    """x: [batch, nb_movies] (f32 or bf16). params: see init_params."""
    batch, nb_movies = x.shape
    itemsize = jnp.dtype(x.dtype).itemsize
    if tb is None:
        tb = _pick_tb(batch, nb_movies, itemsize)
    tb = max(_SUBLANE, _round_up(tb, _SUBLANE))

    w1, b1 = params["w1"], params["b1"]   # (20, nb_movies), (1, 20)
    w2, b2 = params["w2"], params["b2"]   # (20, 10),        (1, 10)
    w3, b3 = params["w3"], params["b3"]   # (10, 20),        (1, 20)
    w4, b4 = params["w4"], params["b4"]   # (20, nb_movies), (1, nb_movies)

    def resident(arr):
        # Whole array as one block, same block index every grid step ->
        # stays in VMEM across the batch loop (no re-DMA).
        return pl.BlockSpec(arr.shape, lambda i: (0, 0))

    grid = (pl.cdiv(batch, tb),)

    weight_bytes = sum(int(a.size) * jnp.dtype(a.dtype).itemsize
                       for a in (w1, b1, w2, b2, w3, b3, w4, b4))
    cost = pl.CostEstimate(
        flops=int(2 * batch * (20 * nb_movies + 20 * 10 + 10 * 20 + 20 * nb_movies)),
        transcendentals=int(batch * (20 + 10 + 20)),
        bytes_accessed=int(2 * batch * nb_movies * itemsize + weight_bytes),
    )

    out = pl.pallas_call(
        sae_kernel,
        out_shape=jax.ShapeDtypeStruct((batch, nb_movies), x.dtype),
        grid_spec=pltpu.PrefetchScalarGridSpec(
            num_scalar_prefetch=0,
            grid=grid,
            in_specs=[
                pl.BlockSpec((tb, nb_movies), lambda i: (i, 0)),   # x: streamed
                resident(w1), resident(b1),
                resident(w2), resident(b2),
                resident(w3), resident(b3),
                resident(w4), resident(b4),
            ],
            out_specs=pl.BlockSpec((tb, nb_movies), lambda i: (i, 0)),
        ),
        compiler_params=pltpu.CompilerParams(
            dimension_semantics=("parallel",),      # megacore split on v7x
            vmem_limit_bytes=48 * 1024 * 1024,      # safe on v5e/v6e/v7x
        ),
        cost_estimate=cost,
    )(x, w1, b1, w2, b2, w3, b3, w4, b4)

    return out


def init_params(key, nb_movies):
    """Deterministic init mimicking PyTorch Linear's U(-1/sqrt(in), 1/sqrt(in)).

    Layouts chosen for lane-density in the kernel:
      w1: (20, nb_movies)  [PyTorch (out, in) layout; contracted NT]
      w2: (20, 10), w3: (10, 20), w4: (20, nb_movies)  [(in, out) layouts]
      biases: (1, out)
    """
    specs = [  # (shape, fan_in)
        ((20, nb_movies), nb_movies),   # fc1 weight (out, in)
        ((20, 10), 20),                 # fc2 weight (in, out)
        ((10, 20), 10),                 # fc3 weight (in, out)
        ((20, nb_movies), 20),          # fc4 weight (in, out)
    ]
    bias_dims = [20, 10, 20, nb_movies]
    params = {}
    keys = jax.random.split(key, 2 * len(specs))
    for idx, ((shape, fan_in), bdim) in enumerate(zip(specs, bias_dims)):
        bound = 1.0 / jnp.sqrt(jnp.float32(fan_in))
        params[f"w{idx + 1}"] = jax.random.uniform(
            keys[2 * idx], shape, jnp.float32, -bound, bound)
        params[f"b{idx + 1}"] = jax.random.uniform(
            keys[2 * idx + 1], (1, bdim), jnp.float32, -bound, bound)
    return params


def sae_reference(x, params):
    """Pure-JAX reference for validation (same math as the kernel)."""
    h = _sigmoid(x @ params["w1"].T + params["b1"])
    h = _sigmoid(h @ params["w2"] + params["b2"])
    h = _sigmoid(h @ params["w3"] + params["b3"])
    return h @ params["w4"] + params["b4"]


if __name__ == "__main__":
    key = jax.random.PRNGKey(0)
    k_params, k_x = jax.random.split(key)

    nb_movies = 200   # deliberately NOT a multiple of 128 (no wrapper padding now)
    batch = 20        # deliberately NOT a multiple of tb -> ragged last tile

    params = init_params(k_params, nb_movies)
    # Ratings-like input: mostly zeros with a few nonzero entries.
    x = jax.random.uniform(k_x, (batch, nb_movies), jnp.float32, 0.0, 5.0)
    x = jnp.where(x > 4.0, x, 0.0)

    out = jax.block_until_ready(sae_forward(x, params))   # auto tb -> 16, grid=(2,)
    ref = sae_reference(x, params)

    assert out.shape == (batch, nb_movies)
    assert jnp.allclose(out, ref, atol=1e-5, rtol=1e-5)

    print("KERNEL_OK")
</pallas_src>

<mosaic_0001>
module attributes {stable_mosaic.version = 11 : i64} {
  func.func @sae_kernel(%arg0: i32, %arg1: memref<16x200xf32, #tpu.memory_space<vmem>>, %arg2: memref<20x200xf32, #tpu.memory_space<vmem>>, %arg3: memref<1x20xf32, #tpu.memory_space<vmem>>, %arg4: memref<20x10xf32, #tpu.memory_space<vmem>>, %arg5: memref<1x10xf32, #tpu.memory_space<vmem>>, %arg6: memref<10x20xf32, #tpu.memory_space<vmem>>, %arg7: memref<1x20xf32, #tpu.memory_space<vmem>>, %arg8: memref<20x200xf32, #tpu.memory_space<vmem>>, %arg9: memref<1x200xf32, #tpu.memory_space<vmem>>, %arg10: memref<16x200xf32, #tpu.memory_space<vmem>>) attributes {dimension_semantics = [#tpu.dimension_semantics<parallel>], iteration_bounds = array<i64: 2>, scalar_prefetch = 0 : i64, scratch_operands = 0 : i64, tpu.core_type = #tpu.core_type<tc>, window_params = [{transform_indices = @transform_0, window_bounds = array<i64: 16, 200>}, {pipeline_mode = #tpu.pipeline_mode<synchronous>, transform_indices = @transform_1, window_bounds = array<i64: 20, 200>}, {pipeline_mode = #tpu.pipeline_mode<synchronous>, transform_indices = @transform_2, window_bounds = array<i64: 1, 20>}, {pipeline_mode = #tpu.pipeline_mode<synchronous>, transform_indices = @transform_3, window_bounds = array<i64: 20, 10>}, {pipeline_mode = #tpu.pipeline_mode<synchronous>, transform_indices = @transform_4, window_bounds = array<i64: 1, 10>}, {pipeline_mode = #tpu.pipeline_mode<synchronous>, transform_indices = @transform_5, window_bounds = array<i64: 10, 20>}, {pipeline_mode = #tpu.pipeline_mode<synchronous>, transform_indices = @transform_6, window_bounds = array<i64: 1, 20>}, {pipeline_mode = #tpu.pipeline_mode<synchronous>, transform_indices = @transform_7, window_bounds = array<i64: 20, 200>}, {pipeline_mode = #tpu.pipeline_mode<synchronous>, transform_indices = @transform_8, window_bounds = array<i64: 1, 200>}, {transform_indices = @transform_9, window_bounds = array<i64: 16, 200>}]} {
    %c0 = arith.constant 0 : index
    %c0_0 = arith.constant 0 : index
    %0 = vector.load %arg1[%c0, %c0_0] : memref<16x200xf32, #tpu.memory_space<vmem>>, vector<16x200xf32>
    %c0_1 = arith.constant 0 : index
    %c0_2 = arith.constant 0 : index
    %1 = vector.load %arg2[%c0_1, %c0_2] : memref<20x200xf32, #tpu.memory_space<vmem>>, vector<20x200xf32>
    %cst = arith.constant dense<0.000000e+00> : vector<16x20xf32>
    %2 = tpu.matmul %0, %1, %cst {dimension_numbers = #tpu.dot_dimension_numbers<[1], [1], [0], [0], [0, 0, 1, 0], [], []>} : vector<16x200xf32>, vector<20x200xf32>, vector<16x20xf32> -> vector<16x20xf32>
    %c0_3 = arith.constant 0 : index
    %c0_4 = arith.constant 0 : index
    %3 = vector.load %arg3[%c0_3, %c0_4] : memref<1x20xf32, #tpu.memory_space<vmem>>, vector<1x20xf32>
    %4 = vector.broadcast %3 : vector<1x20xf32> to vector<16x20xf32>
    %5 = arith.addf %2, %4 : vector<16x20xf32>
    %cst_5 = arith.constant 0.000000e+00 : f32
    %6 = vector.broadcast %cst_5 : f32 to vector<16x20xf32>
    %7 = arith.subf %6, %5 : vector<16x20xf32>
    %8 = math.exp %7 : vector<16x20xf32>
    %cst_6 = arith.constant 1.000000e+00 : f32
    %9 = vector.broadcast %cst_6 : f32 to vector<16x20xf32>
    %10 = arith.addf %9, %8 : vector<16x20xf32>
    %cst_7 = arith.constant 1.000000e+00 : f32
    %11 = vector.broadcast %cst_7 : f32 to vector<16x20xf32>
    %12 = arith.divf %11, %10 : vector<16x20xf32>
    %c0_8 = arith.constant 0 : index
    %c0_9 = arith.constant 0 : index
    %13 = vector.load %arg4[%c0_8, %c0_9] : memref<20x10xf32, #tpu.memory_space<vmem>>, vector<20x10xf32>
    %cst_10 = arith.constant dense<0.000000e+00> : vector<16x10xf32>
    %14 = tpu.matmul %12, %13, %cst_10 {dimension_numbers = #tpu.dot_dimension_numbers<[1], [0], [0], [1], [0, 0, 1, 1], [], []>} : vector<16x20xf32>, vector<20x10xf32>, vector<16x10xf32> -> vector<16x10xf32>
    %c0_11 = arith.constant 0 : index
    %c0_12 = arith.constant 0 : index
    %15 = vector.load %arg5[%c0_11, %c0_12] : memref<1x10xf32, #tpu.memory_space<vmem>>, vector<1x10xf32>
    %16 = vector.broadcast %15 : vector<1x10xf32> to vector<16x10xf32>
    %17 = arith.addf %14, %16 : vector<16x10xf32>
    %cst_13 = arith.constant 0.000000e+00 : f32
    %18 = vector.broadcast %cst_13 : f32 to vector<16x10xf32>
    %19 = arith.subf %18, %17 : vector<16x10xf32>
    %20 = math.exp %19 : vector<16x10xf32>
    %cst_14 = arith.constant 1.000000e+00 : f32
    %21 = vector.broadcast %cst_14 : f32 to vector<16x10xf32>
    %22 = arith.addf %21, %20 : vector<16x10xf32>
    %cst_15 = arith.constant 1.000000e+00 : f32
    %23 = vector.broadcast %cst_15 : f32 to vector<16x10xf32>
    %24 = arith.divf %23, %22 : vector<16x10xf32>
    %c0_16 = arith.constant 0 : index
    %c0_17 = arith.constant 0 : index
    %25 = vector.load %arg6[%c0_16, %c0_17] : memref<10x20xf32, #tpu.memory_space<vmem>>, vector<10x20xf32>
    %cst_18 = arith.constant dense<0.000000e+00> : vector<16x20xf32>
    %26 = tpu.matmul %24, %25, %cst_18 {dimension_numbers = #tpu.dot_dimension_numbers<[1], [0], [0], [1], [0, 0, 1, 1], [], []>} : vector<16x10xf32>, vector<10x20xf32>, vector<16x20xf32> -> vector<16x20xf32>
    %c0_19 = arith.constant 0 : index
    %c0_20 = arith.constant 0 : index
    %27 = vector.load %arg7[%c0_19, %c0_20] : memref<1x20xf32, #tpu.memory_space<vmem>>, vector<1x20xf32>
    %28 = vector.broadcast %27 : vector<1x20xf32> to vector<16x20xf32>
    %29 = arith.addf %26, %28 : vector<16x20xf32>
    %cst_21 = arith.constant 0.000000e+00 : f32
    %30 = vector.broadcast %cst_21 : f32 to vector<16x20xf32>
    %31 = arith.subf %30, %29 : vector<16x20xf32>
    %32 = math.exp %31 : vector<16x20xf32>
    %cst_22 = arith.constant 1.000000e+00 : f32
    %33 = vector.broadcast %cst_22 : f32 to vector<16x20xf32>
    %34 = arith.addf %33, %32 : vector<16x20xf32>
    %cst_23 = arith.constant 1.000000e+00 : f32
    %35 = vector.broadcast %cst_23 : f32 to vector<16x20xf32>
    %36 = arith.divf %35, %34 : vector<16x20xf32>
    %c0_24 = arith.constant 0 : index
    %c0_25 = arith.constant 0 : index
    %37 = vector.load %arg8[%c0_24, %c0_25] : memref<20x200xf32, #tpu.memory_space<vmem>>, vector<20x200xf32>
    %cst_26 = arith.constant dense<0.000000e+00> : vector<16x200xf32>
    %38 = tpu.matmul %36, %37, %cst_26 {dimension_numbers = #tpu.dot_dimension_numbers<[1], [0], [0], [1], [0, 0, 1, 1], [], []>} : vector<16x20xf32>, vector<20x200xf32>, vector<16x200xf32> -> vector<16x200xf32>
    %c0_27 = arith.constant 0 : index
    %c0_28 = arith.constant 0 : index
    %39 = vector.load %arg9[%c0_27, %c0_28] : memref<1x200xf32, #tpu.memory_space<vmem>>, vector<1x200xf32>
    %40 = vector.broadcast %39 : vector<1x200xf32> to vector<16x200xf32>
    %41 = arith.addf %38, %40 : vector<16x200xf32>
    %c0_29 = arith.constant 0 : index
    %c0_30 = arith.constant 0 : index
    %42 = vector.load %arg10[%c0_29, %c0_30] : memref<16x200xf32, #tpu.memory_space<vmem>>, vector<16x200xf32>
    tpu.vector_store %arg10[%c0_29, %c0_30], %41 {strides = array<i32>} : memref<16x200xf32, #tpu.memory_space<vmem>>, vector<16x200xf32>,
    return
  }
  func.func @transform_0(%arg0: i32) -> (i32, i32) {
    %c0_i32 = arith.constant 0 : i32
    %c0_i32_0 = arith.constant 0 : i32
    return %arg0, %c0_i32 : i32, i32
  }
  func.func @transform_1(%arg0: i32) -> (i32, i32) {
    %c0_i32 = arith.constant 0 : i32
    %c0_i32_0 = arith.constant 0 : i32
    %c0_i32_1 = arith.constant 0 : i32
    return %c0_i32, %c0_i32_0 : i32, i32
  }
  func.func @transform_2(%arg0: i32) -> (i32, i32) {
    %c0_i32 = arith.constant 0 : i32
    %c0_i32_0 = arith.constant 0 : i32
    %c0_i32_1 = arith.constant 0 : i32
    return %c0_i32, %c0_i32_0 : i32, i32
  }
  func.func @transform_3(%arg0: i32) -> (i32, i32) {
    %c0_i32 = arith.constant 0 : i32
    %c0_i32_0 = arith.constant 0 : i32
    %c0_i32_1 = arith.constant 0 : i32
    return %c0_i32, %c0_i32_0 : i32, i32
  }
  func.func @transform_4(%arg0: i32) -> (i32, i32) {
    %c0_i32 = arith.constant 0 : i32
    %c0_i32_0 = arith.constant 0 : i32
    %c0_i32_1 = arith.constant 0 : i32
    return %c0_i32, %c0_i32_0 : i32, i32
  }
  func.func @transform_5(%arg0: i32) -> (i32, i32) {
    %c0_i32 = arith.constant 0 : i32
    %c0_i32_0 = arith.constant 0 : i32
    %c0_i32_1 = arith.constant 0 : i32
    return %c0_i32, %c0_i32_0 : i32, i32
  }
  func.func @transform_6(%arg0: i32) -> (i32, i32) {
    %c0_i32 = arith.constant 0 : i32
    %c0_i32_0 = arith.constant 0 : i32
    %c0_i32_1 = arith.constant 0 : i32
    return %c0_i32, %c0_i32_0 : i32, i32
  }
  func.func @transform_7(%arg0: i32) -> (i32, i32) {
    %c0_i32 = arith.constant 0 : i32
    %c0_i32_0 = arith.constant 0 : i32
    %c0_i32_1 = arith.constant 0 : i32
    return %c0_i32, %c0_i32_0 : i32, i32
  }
  func.func @transform_8(%arg0: i32) -> (i32, i32) {
    %c0_i32 = arith.constant 0 : i32
    %c0_i32_0 = arith.constant 0 : i32
    %c0_i32_1 = arith.constant 0 : i32
    return %c0_i32, %c0_i32_0 : i32, i32
  }
  func.func @transform_9(%arg0: i32) -> (i32, i32) {
    %c0_i32 = arith.constant 0 : i32
    %c0_i32_0 = arith.constant 0 : i32
    return %arg0, %c0_i32 : i32, i32
  }
}

</mosaic_0001>

<llo_original>
// kernel: tpu_custom_call.1
$region0: #{tpu_custom_call.1}
  #allocation0 [shape = 'u32[]', space=smem, size = 0x4, offset = 0x4, fixed_abs, tag = 'smem constant byte address 0x4 - core index']
  #allocation1 [shape = 'u32[144,128]{1,0:T(1,128)}', space=vmem, size = 0x12000, scoped, tag = 'internal scratch']
  %s0 = inlined_call_operand.hbm [shape: f32[20,200], index: 0, kind: input, shape index: {}]
  %s1 = inlined_call_operand.hbm [shape: f32[20,200], index: 1, kind: input, shape index: {}]
  %s2 = inlined_call_operand.hbm [shape: f32[1,20], index: 2, kind: input, shape index: {}]
  %s3 = inlined_call_operand.vmem [shape: f32[20,10], index: 3, kind: input, shape index: {}]
  %s4 = inlined_call_operand.hbm [shape: f32[1,10], index: 4, kind: input, shape index: {}]
  %s5 = inlined_call_operand.vmem [shape: f32[10,20], index: 5, kind: input, shape index: {}]
  %s6 = inlined_call_operand.hbm [shape: f32[1,20], index: 6, kind: input, shape index: {}]
  %s7 = inlined_call_operand.vmem [shape: f32[20,200], index: 7, kind: input, shape index: {}]
  %s8 = inlined_call_operand.vmem [shape: f32[1,200], index: 8, kind: input, shape index: {}]
  %s9 = inlined_call_operand.hbm [shape: f32[20,200], index: 9, kind: output, shape index: {}]
  %s10 = sld [smem:[#allocation0]]
  $region89: #{tpu_custom_call.1} parent=0
    _
  %s12 = ssub.s32 1, %s10
  %s13 = scalar_select 0, %s12, %s10
  $region1: #{tpu_custom_call.1} parent=0
    #allocation2 [shape = 'u8[32768]{0}', space=vmem, size = 0x8000, scoped, tag = 'input window, operand 0']
    #allocation3 [shape = 's32[2]{0}', space=sflag, size = 0x8, scoped, tag = 'scoped memory for tpu_custom_call.1']
    #allocation4 [shape = 's32[2]{0}', space=sflag, size = 0x8, scoped, tag = 'scoped memory for tpu_custom_call.1']
    #allocation5 [shape = 'u8[24576]{0}', space=vmem, size = 0x6000, scoped, tag = 'input window, operand 1, single buffered']
    #allocation6 [shape = 's32[1]{0}', space=sflag, size = 0x4, scoped, tag = 'scoped memory for tpu_custom_call.1']
    #allocation7 [shape = 'u8[512]{0}', space=vmem, size = 0x400, scoped, tag = 'input window, operand 2, single buffered']
    #allocation8 [shape = 'u8[512]{0}', space=vmem, size = 0x400, scoped, tag = 'input window, operand 4, single buffered']
    #allocation9 [shape = 's32[1]{0}', space=sflag, size = 0x4, scoped, tag = 'scoped memory for tpu_custom_call.1']
    #allocation10 [shape = 'u8[512]{0}', space=vmem, size = 0x400, scoped, tag = 'input window, operand 6, single buffered']
    #allocation11 [shape = 'u8[32768]{0}', space=vmem, size = 0x8000, scoped, tag = 'output window, operand 0']
    %14 = vsyncpa [#allocation3], 0
    %s15 = scalar_lea.sflag [#allocation3], 1
    %16 = vsyncpa %s15, 0
    %17 = vsyncpa [#allocation6], 0
    %18 = vsyncpa [#allocation9], 0
    %19 = vsyncpa [#allocation4], 0
    %s20 = scalar_lea.sflag [#allocation4], 1
    %21 = vsyncpa %s20, 0
    loop: start=0, step=1, limit=4
    $region2: #{tpu_custom_call.1} parent=1 // loop_pre_header
      _
    $region3: #{tpu_custom_call.1} parent=1 // loop_header
      %s23 = sphi 0, %s27
      %p24 = scmp.ge.s32.totalorder %s23, 4
      %s33 = sphi 0, %s35
      %s36 = sphi 0, %s33
      %s37 = sphi 0, %s36
      %s53 = sphi 0, %s37
      %s57 = sphi 0, %s57
      %s59 = sphi 0, %s57
      %s60 = sphi 0, %s59
      %s74 = sphi 0, %s60
      %s78 = sphi 0, %s78
      %s80 = sphi 0, %s78
      %s81 = sphi 0, %s80
      %s95 = sphi 0, %s81
      %s99 = sphi 0, %s99
      %s101 = sphi 0, %s99
      %s102 = sphi 0, %s101
      %s116 = sphi 0, %s102
      %s120 = sphi 0, %s120
      %s122 = sphi 0, %s120
      %s123 = sphi 0, %s122
      %s137 = sphi 0, %s123
      %s141 = sphi 0, %s141
      %s143 = sphi 0, %s141
      %s144 = sphi 0, %s143
      %s158 = sphi 0, %s144
      %s162 = sphi 0, %s162
      %s164 = sphi 0, %s162
      %s165 = sphi 0, %s164
      %s179 = sphi 0, %s165
      %s183 = sphi 0, %s183
      %s185 = sphi 0, %s183
      %s186 = sphi 0, %s185
      %s200 = sphi 0, %s186
      %s204 = sphi 0, %s204
      %s206 = sphi 0, %s204
      %s207 = sphi 0, %s206
      %s221 = sphi 0, %s207
      %s227 = sphi 0, %s229
      %s230 = sphi 0, %s227
      %s231 = sphi 0, %s230
      %s247 = sphi 0, %s231
    $region4: #{tpu_custom_call.1} parent=1 // loop_header_branch
      %26 = sbr.rel (%p24) target = $region8
    $region5: #{tpu_custom_call.1} parent=1 // loop_body
      %s28 = ssub.s32 %s23, 1
      %s29 = ssub.s32 %s23, 2
      %s30 = sadd.s32 %s23, 1
      %s31 = ssub.s32 %s23, %s30
      %p32 = scmp.eq.s32.totalorder %s31, 0
      %s34 = sadd.s32 %s33, 1
      %s35 = scalar_select %p32, %s33, %s34
      %p38 = pneg %p32
      %p39 = scmp.eq.s32.totalorder %s23, 1
      %p40 = por %p38, %p39
      %p41 = scmp.ne.s32.totalorder %s33, %s36
      %p42 = scmp.eq.s32.totalorder %s23, 0
      %p43 = por %p41, %p42
      %p44 = scmp.ne.s32.totalorder %s33, %s36
      %p45 = scmp.eq.s32.totalorder %s28, 1
      %p46 = por %p44, %p45
      %p47 = scmp.ne.s32.totalorder %s36, %s37
      %p48 = scmp.eq.s32.totalorder %s28, 0
      %p49 = por %p47, %p48
      %p50 = scmp.ne.s32.totalorder %s36, %s37
      %p51 = scmp.eq.s32.totalorder %s29, 1
      %p52 = por %p50, %p51
      %p54 = scmp.ne.s32.totalorder %s37, %s53
      %p55 = scmp.eq.s32.totalorder %s29, 0
      %p56 = por %p54, %p55
      %s58 = sadd.s32 %s57, 1
      %p61 = scmp.eq.s32.totalorder %s23, 1
      %p62 = scmp.ne.s32.totalorder %s57, %s59
      %p63 = scmp.eq.s32.totalorder %s23, 0
      %p64 = por %p62, %p63
      %p65 = scmp.ne.s32.totalorder %s57, %s59
      %p66 = scmp.eq.s32.totalorder %s28, 1
      %p67 = por %p65, %p66
      %p68 = scmp.ne.s32.totalorder %s59, %s60
      %p69 = scmp.eq.s32.totalorder %s28, 0
      %p70 = por %p68, %p69
      %p71 = scmp.ne.s32.totalorder %s59, %s60
      %p72 = scmp.eq.s32.totalorder %s29, 1
      %p73 = por %p71, %p72
      %p75 = scmp.ne.s32.totalorder %s60, %s74
      %p76 = scmp.eq.s32.totalorder %s29, 0
      %p77 = por %p75, %p76
      %s79 = sadd.s32 %s78, 1
      %p82 = scmp.eq.s32.totalorder %s23, 1
      %p83 = scmp.ne.s32.totalorder %s78, %s80
      %p84 = scmp.eq.s32.totalorder %s23, 0
      %p85 = por %p83, %p84
      %p86 = scmp.ne.s32.totalorder %s78, %s80
      %p87 = scmp.eq.s32.totalorder %s28, 1
      %p88 = por %p86, %p87
      %p89 = scmp.ne.s32.totalorder %s80, %s81
      %p90 = scmp.eq.s32.totalorder %s28, 0
      %p91 = por %p89, %p90
      %p92 = scmp.ne.s32.totalorder %s80, %s81
      %p93 = scmp.eq.s32.totalorder %s29, 1
      %p94 = por %p92, %p93
      %p96 = scmp.ne.s32.totalorder %s81, %s95
      %p97 = scmp.eq.s32.totalorder %s29, 0
      %p98 = por %p96, %p97
      %s100 = sadd.s32 %s99, 1
      %p103 = scmp.eq.s32.totalorder %s23, 1
      %p104 = scmp.ne.s32.totalorder %s99, %s101
      %p105 = scmp.eq.s32.totalorder %s23, 0
      %p106 = por %p104, %p105
      %p107 = scmp.ne.s32.totalorder %s99, %s101
      %p108 = scmp.eq.s32.totalorder %s28, 1
      %p109 = por %p107, %p108
      %p110 = scmp.ne.s32.totalorder %s101, %s102
      %p111 = scmp.eq.s32.totalorder %s28, 0
      %p112 = por %p110, %p111
      %p113 = scmp.ne.s32.totalorder %s101, %s102
      %p114 = scmp.eq.s32.totalorder %s29, 1
      %p115 = por %p113, %p114
      %p117 = scmp.ne.s32.totalorder %s102, %s116
      %p118 = scmp.eq.s32.totalorder %s29, 0
      %p119 = por %p117, %p118
      %s121 = sadd.s32 %s120, 1
      %p124 = scmp.eq.s32.totalorder %s23, 1
      %p125 = scmp.ne.s32.totalorder %s120, %s122
      %p126 = scmp.eq.s32.totalorder %s23, 0
      %p127 = por %p125, %p126
      %p128 = scmp.ne.s32.totalorder %s120, %s122
      %p129 = scmp.eq.s32.totalorder %s28, 1
      %p130 = por %p128, %p129
      %p131 = scmp.ne.s32.totalorder %s122, %s123
      %p132 = scmp.eq.s32.totalorder %s28, 0
      %p133 = por %p131, %p132
      %p134 = scmp.ne.s32.totalorder %s122, %s123
      %p135 = scmp.eq.s32.totalorder %s29, 1
      %p136 = por %p134, %p135
      %p138 = scmp.ne.s32.totalorder %s123, %s137
      %p139 = scmp.eq.s32.totalorder %s29, 0
      %p140 = por %p138, %p139
      %s142 = sadd.s32 %s141, 1
      %p145 = scmp.eq.s32.totalorder %s23, 1
      %p146 = scmp.ne.s32.totalorder %s141, %s143
      %p147 = scmp.eq.s32.totalorder %s23, 0
      %p148 = por %p146, %p147
      %p149 = scmp.ne.s32.totalorder %s141, %s143
      %p150 = scmp.eq.s32.totalorder %s28, 1
      %p151 = por %p149, %p150
      %p152 = scmp.ne.s32.totalorder %s143, %s144
      %p153 = scmp.eq.s32.totalorder %s28, 0
      %p154 = por %p152, %p153
      %p155 = scmp.ne.s32.totalorder %s143, %s144
      %p156 = scmp.eq.s32.totalorder %s29, 1
      %p157 = por %p155, %p156
      %p159 = scmp.ne.s32.totalorder %s144, %s158
      %p160 = scmp.eq.s32.totalorder %s29, 0
      %p161 = por %p159, %p160
      %s163 = sadd.s32 %s162, 1
      %p166 = scmp.eq.s32.totalorder %s23, 1
      %p167 = scmp.ne.s32.totalorder %s162, %s164
      %p168 = scmp.eq.s32.totalorder %s23, 0
      %p169 = por %p167, %p168
      %p170 = scmp.ne.s32.totalorder %s162, %s164
      %p171 = scmp.eq.s32.totalorder %s28, 1
      %p172 = por %p170, %p171
      %p173 = scmp.ne.s32.totalorder %s164, %s165
      %p174 = scmp.eq.s32.totalorder %s28, 0
      %p175 = por %p173, %p174
      %p176 = scmp.ne.s32.totalorder %s164, %s165
      %p177 = scmp.eq.s32.totalorder %s29, 1
      %p178 = por %p176, %p177
      %p180 = scmp.ne.s32.totalorder %s165, %s179
      %p181 = scmp.eq.s32.totalorder %s29, 0
      %p182 = por %p180, %p181
      %s184 = sadd.s32 %s183, 1
      %p187 = scmp.eq.s32.totalorder %s23, 1
      %p188 = scmp.ne.s32.totalorder %s183, %s185
      %p189 = scmp.eq.s32.totalorder %s23, 0
      %p190 = por %p188, %p189
      %p191 = scmp.ne.s32.totalorder %s183, %s185
      %p192 = scmp.eq.s32.totalorder %s28, 1
      %p193 = por %p191, %p192
      %p194 = scmp.ne.s32.totalorder %s185, %s186
      %p195 = scmp.eq.s32.totalorder %s28, 0
      %p196 = por %p194, %p195
      %p197 = scmp.ne.s32.totalorder %s185, %s186
      %p198 = scmp.eq.s32.totalorder %s29, 1
      %p199 = por %p197, %p198
      %p201 = scmp.ne.s32.totalorder %s186, %s200
      %p202 = scmp.eq.s32.totalorder %s29, 0
      %p203 = por %p201, %p202
      %s205 = sadd.s32 %s204, 1
      %p208 = scmp.eq.s32.totalorder %s23, 1
      %p209 = scmp.ne.s32.totalorder %s204, %s206
      %p210 = scmp.eq.s32.totalorder %s23, 0
      %p211 = por %p209, %p210
      %p212 = scmp.ne.s32.totalorder %s204, %s206
      %p213 = scmp.eq.s32.totalorder %s28, 1
      %p214 = por %p212, %p213
      %p215 = scmp.ne.s32.totalorder %s206, %s207
      %p216 = scmp.eq.s32.totalorder %s28, 0
      %p217 = por %p215, %p216
      %p218 = scmp.ne.s32.totalorder %s206, %s207
      %p219 = scmp.eq.s32.totalorder %s29, 1
      %p220 = por %p218, %p219
      %p222 = scmp.ne.s32.totalorder %s207, %s221
      %p223 = scmp.eq.s32.totalorder %s29, 0
      %p224 = por %p222, %p223
      %s225 = ssub.s32 %s23, %s30
      %p226 = scmp.eq.s32.totalorder %s225, 0
      %s228 = sadd.s32 %s227, 1
      %s229 = scalar_select %p226, %s227, %s228
      %p232 = pneg %p226
      %p233 = scmp.eq.s32.totalorder %s23, 1
      %p234 = por %p232, %p233
      %p235 = scmp.ne.s32.totalorder %s227, %s230
      %p236 = scmp.eq.s32.totalorder %s23, 0
      %p237 = por %p235, %p236
      %p238 = scmp.ne.s32.totalorder %s227, %s230
      %p239 = scmp.eq.s32.totalorder %s28, 1
      %p240 = por %p238, %p239
      %p241 = scmp.ne.s32.totalorder %s230, %s231
      %p242 = scmp.eq.s32.totalorder %s28, 0
      %p243 = por %p241, %p242
      %p244 = scmp.ne.s32.totalorder %s230, %s231
      %p245 = scmp.eq.s32.totalorder %s29, 1
      %p246 = por %p244, %p245
      %p248 = scmp.ne.s32.totalorder %s231, %s247
      %p249 = scmp.eq.s32.totalorder %s29, 0
      %p250 = por %p248, %p249
      %p251 = scmp.le.s32.totalorder 1, %s23
      %p252 = scmp.lt.s32.totalorder %s23, 3
      %p253 = pnand %p251, %p252
      %p254 = pneg %p253
      // Predicated region
      $region9: #{tpu_custom_call.1} parent=5 // pred_check
        _
      $region10: #{tpu_custom_call.1} parent=5 // pred_check_branch
        %256 = sbr.rel (%p253) target = $region12
      $region11: #{tpu_custom_call.1} parent=5 // pred_region
        %s257 = ssub.s32 %s23, 1
        // Predicated region
        $region13: #{tpu_custom_call.1} parent=11 // pred_check
          %p258 = pneg %p70
        $region14: #{tpu_custom_call.1} parent=11 // pred_check_branch
          %260 = sbr.rel (%p258) target = $region16
        $region15: #{tpu_custom_call.1} parent=11 // pred_region
          %s262 = ssub.s32 768, 768
          %263 = vsyncadd [#allocation6], %s262
          %s264 = sshll.u32 [#allocation5], 4
          %s265 = int_to_ptr.vmem [resolvable:$true] %s264
          %270 = dma.hbm_to_vmem [thread:$0]  %s1, 768, %s265, [#allocation6], 256, 256, 16
        $region16: #{tpu_custom_call.1} parent=11 // pred_fallthru
          _
        // Predicated region
        $region17: #{tpu_custom_call.1} parent=11 // pred_check
          %p271 = pneg %p91
        $region18: #{tpu_custom_call.1} parent=11 // pred_check_branch
          %273 = sbr.rel (%p271) target = $region20
        $region19: #{tpu_custom_call.1} parent=11 // pred_region
          %s275 = ssub.s32 16, 16
          %276 = vsyncadd [#allocation6], %s275
          %s278 = sshll.u32 [#allocation7], 4
          %s279 = int_to_ptr.vmem [resolvable:$true] %s278
          %281 = dma.hbm_to_vmem [thread:$0]  %s2, 16, %s279, [#allocation6]
        $region20: #{tpu_custom_call.1} parent=11 // pred_fallthru
          _
        // Predicated region
        $region21: #{tpu_custom_call.1} parent=11 // pred_check
          %p282 = pneg %p112
        $region22: #{tpu_custom_call.1} parent=11 // pred_check_branch
          %284 = sbr.rel (%p282) target = $region24
        $region23: #{tpu_custom_call.1} parent=11 // pred_region
          _
        $region24: #{tpu_custom_call.1} parent=11 // pred_fallthru
          _
        // Predicated region
        $region25: #{tpu_custom_call.1} parent=11 // pred_check
          %p285 = pneg %p133
        $region26: #{tpu_custom_call.1} parent=11 // pred_check_branch
          %287 = sbr.rel (%p285) target = $region28
        $region27: #{tpu_custom_call.1} parent=11 // pred_region
          %s289 = ssub.s32 16, 16
          %290 = vsyncadd [#allocation9], %s289
          %s292 = sshll.u32 [#allocation8], 4
          %s293 = int_to_ptr.vmem [resolvable:$true] %s292
          %295 = dma.hbm_to_vmem [thread:$0]  %s4, 16, %s293, [#allocation9]
        $region28: #{tpu_custom_call.1} parent=11 // pred_fallthru
          _
        // Predicated region
        $region29: #{tpu_custom_call.1} parent=11 // pred_check
          %p296 = pneg %p154
        $region30: #{tpu_custom_call.1} parent=11 // pred_check_branch
          %298 = sbr.rel (%p296) target = $region32
        $region31: #{tpu_custom_call.1} parent=11 // pred_region
          _
        $region32: #{tpu_custom_call.1} parent=11 // pred_fallthru
          _
        // Predicated region
        $region33: #{tpu_custom_call.1} parent=11 // pred_check
          %p299 = pneg %p175
        $region34: #{tpu_custom_call.1} parent=11 // pred_check_branch
          %301 = sbr.rel (%p299) target = $region36
        $region35: #{tpu_custom_call.1} parent=11 // pred_region
          %s303 = ssub.s32 16, 16
          %304 = vsyncadd [#allocation9], %s303
          %s306 = sshll.u32 [#allocation10], 4
          %s307 = int_to_ptr.vmem [resolvable:$true] %s306
          %309 = dma.hbm_to_vmem [thread:$0]  %s6, 16, %s307, [#allocation9]
        $region36: #{tpu_custom_call.1} parent=11 // pred_fallthru
          _
        // Predicated region
        $region37: #{tpu_custom_call.1} parent=11 // pred_check
          %p310 = pneg %p196
        $region38: #{tpu_custom_call.1} parent=11 // pred_check_branch
          %312 = sbr.rel (%p310) target = $region40
        $region39: #{tpu_custom_call.1} parent=11 // pred_region
          _
        $region40: #{tpu_custom_call.1} parent=11 // pred_fallthru
          _
        // Predicated region
        $region41: #{tpu_custom_call.1} parent=11 // pred_check
          %p313 = pneg %p217
        $region42: #{tpu_custom_call.1} parent=11 // pred_check_branch
          %315 = sbr.rel (%p313) target = $region44
        $region43: #{tpu_custom_call.1} parent=11 // pred_region
          _
        $region44: #{tpu_custom_call.1} parent=11 // pred_fallthru
          _
      $region12: #{tpu_custom_call.1} parent=5 // pred_fallthru
        _
      %p316 = scmp.lt.s32.totalorder %s23, 2
      // Predicated region
      $region45: #{tpu_custom_call.1} parent=5 // pred_check
        %p317 = pneg %p316
      $region46: #{tpu_custom_call.1} parent=5 // pred_check_branch
        %319 = sbr.rel (%p317) target = $region48
      $region47: #{tpu_custom_call.1} parent=5 // pred_region
        // Predicated region
        $region49: #{tpu_custom_call.1} parent=47 // pred_check
          %p320 = pneg %p43
        $region50: #{tpu_custom_call.1} parent=47 // pred_check_branch
          %322 = sbr.rel (%p320) target = $region52
        $region51: #{tpu_custom_call.1} parent=47 // pred_region
          %s323 = sand.u32 %s33, 1
          %s324 = scalar_lea.sflag [#allocation3], %s323
          %s325 = sand.u32 %s33, 1
          %s326 = smul.addr %s325, 32
          %s327 = scalar_lea.vmem [#allocation2], %s326
          %s328 = smul.u32 2, %s23
          %s329 = ssub.s32 3, %s328
          %p330 = scmp.lt.s32.totalorder %s329, 2
          %s331 = scalar_select %p330, %s329, 2
          %s332 = smul.u32 128, %s331
          %s333 = smul.u32 %s332, 2
          %s335 = ssub.s32 512, %s333
          %336 = vsyncadd %s324, %s335
          %p337 = scmp.ne.s32.totalorder 0, %s333
          %s338 = smul.addr %s328, 2
          %s339 = smul.addr %s338, 128
          %s340 = scalar_lea.hbm %s0, %s339
          %s341 = smul.u32 16, %s331
          %s342 = sshll.u32 %s327, 4
          %s343 = int_to_ptr.vmem [resolvable:$true] %s342
          %s344 = sshll.u32 %s341, 4
          %348 = dma.hbm_to_vmem [thread:$0]  (%p337), %s340, %s344, %s343, %s324, 256, 256, 16
        $region52: #{tpu_custom_call.1} parent=47 // pred_fallthru
          _
      $region48: #{tpu_custom_call.1} parent=5 // pred_fallthru
        _
      %p349 = scmp.le.s32.totalorder 1, %s23
      %p350 = scmp.lt.s32.totalorder %s23, 3
      %p351 = pnand %p349, %p350
      %p352 = pneg %p351
      // Predicated region
      $region53: #{tpu_custom_call.1} parent=5 // pred_check
        _
      $region54: #{tpu_custom_call.1} parent=5 // pred_check_branch
        %354 = sbr.rel (%p351) target = $region56
      $region55: #{tpu_custom_call.1} parent=5 // pred_region
        %s355 = ssub.s32 %s23, 1
        %s356 = sand.u32 %s36, 1
        %s357 = scalar_lea.sflag [#allocation3], %s356
        %s358 = sand.u32 %s36, 1
        %s359 = smul.addr %s358, 32
        %s360 = scalar_lea.vmem [#allocation2], %s359
        // Predicated region
        $region57: #{tpu_custom_call.1} parent=55 // pred_check
          %p361 = pneg %p49
        $region58: #{tpu_custom_call.1} parent=55 // pred_check_branch
          %363 = sbr.rel (%p361) target = $region60
        $region59: #{tpu_custom_call.1} parent=55 // pred_region
          %364 = dma.done %s357, 512
        $region60: #{tpu_custom_call.1} parent=55 // pred_fallthru
          _
        // Predicated region
        $region61: #{tpu_custom_call.1} parent=55 // pred_check
          %p365 = pneg %p70
        $region62: #{tpu_custom_call.1} parent=55 // pred_check_branch
          %367 = sbr.rel (%p365) target = $region64
        $region63: #{tpu_custom_call.1} parent=55 // pred_region
          %368 = dma.done [#allocation6], 768
        $region64: #{tpu_custom_call.1} parent=55 // pred_fallthru
          _
        // Predicated region
        $region65: #{tpu_custom_call.1} parent=55 // pred_check
          %p369 = pneg %p91
        $region66: #{tpu_custom_call.1} parent=55 // pred_check_branch
          %371 = sbr.rel (%p369) target = $region68
        $region67: #{tpu_custom_call.1} parent=55 // pred_region
          %372 = dma.done [#allocation6], 16
        $region68: #{tpu_custom_call.1} parent=55 // pred_fallthru
          _
        // Predicated region
        $region69: #{tpu_custom_call.1} parent=55 // pred_check
          %p373 = pneg %p133
        $region70: #{tpu_custom_call.1} parent=55 // pred_check_branch
          %375 = sbr.rel (%p373) target = $region72
        $region71: #{tpu_custom_call.1} parent=55 // pred_region
          %376 = dma.done [#allocation9], 16
        $region72: #{tpu_custom_call.1} parent=55 // pred_fallthru
          _
        // Predicated region
        $region73: #{tpu_custom_call.1} parent=55 // pred_check
          %p377 = pneg %p175
        $region74: #{tpu_custom_call.1} parent=55 // pred_check_branch
          %379 = sbr.rel (%p377) target = $region76
        $region75: #{tpu_custom_call.1} parent=55 // pred_region
          %380 = dma.done [#allocation9], 16
        $region76: #{tpu_custom_call.1} parent=55 // pred_fallthru
          _
        %s381 = sand.u32 %s36, 1
        %s382 = scalar_lea.sflag [#allocation3], %s381
        %s383 = sand.u32 %s36, 1
        %s384 = smul.addr %s383, 32
        %s385 = scalar_lea.vmem [#allocation2], %s384
        %p386 = pneg %p49
        %p387 = pneg %p46
        %p388 = pneg %p70
        %p389 = pneg %p67
        %p390 = pneg %p91
        %p391 = pneg %p88
        %p392 = pneg %p112
        %p393 = pneg %p109
        %p394 = pneg %p133
        %p395 = pneg %p130
        %p396 = pneg %p154
        %p397 = pneg %p151
        %p398 = pneg %p175
        %p399 = pneg %p172
        %p400 = pneg %p196
        %p401 = pneg %p193
        %p402 = pneg %p217
        %p403 = pneg %p214
        %p404 = pneg %p243
        %p405 = pneg %p240
        %s406 = sand.u32 %s230, 1
        %s407 = scalar_lea.sflag [#allocation4], %s406
        %s408 = sand.u32 %s230, 1
        %s409 = smul.addr %s408, 32
        %s410 = scalar_lea.vmem [#allocation11], %s409
        %s411 = smul.u32 2, %s28
        %s412 = ssub.s32 3, %s411
        %p413 = scmp.lt.s32.totalorder %s412, 2
        %s414 = scalar_select %p413, %s412, 2
        %s415 = smul.u32 128, %s414
        %s416 = smul.u32 %s415, 2
        %s417 = smul.u32 2, %s28
        %s418 = ssub.s32 3, %s417
        %p419 = scmp.lt.s32.totalorder %s418, 2
        %s420 = scalar_select %p419, %s418, 2
        %s421 = smul.u32 128, %s420
        %s422 = smul.u32 %s421, 2
        %v423 = vld [vmem:[%s360] sm:$0xff]
        %v424 = vld [vmem:[%s360 + $0x8] sm:$0xff]
        %v425 = vld [vmem:[%s360 + $0x10] sm:$0xff]
        %v426 = vld [vmem:[%s360 + $0x18] sm:$0xff]
        %v427 = vld [vmem:[#allocation5] sm:$0xff]
        %v428 = vld [vmem:[#allocation5 + $0x8] sm:$0xff]
        %v429 = vld [vmem:[#allocation5 + $0x10] sm:$0xff]
        %v430 = vld [vmem:[#allocation5 + $0x18] sm:$0xff]
        %v431 = vld [vmem:[#allocation5 + $0x20] sm:$0xf]
        %v432 = vld [vmem:[#allocation5 + $0x28] sm:$0xf]
        %v433 = vld [vmem:[#allocation7] sm:$0x1]
        %v435 = vlaneseq
        %v436 = vshrl.u32 %v435, 7
        %v437 = vsub.s32 0, %v436
        %v438 = vrot.slane %v433, %v437
        %vm440 = vcmask 588800
        %v442 = vsel %vm440, %v424, 0
        %v445 = vsel %vm440, %v426, 0
        %v448 = vsel %vm440, %v428, 0
        %v451 = vsel %vm440, %v430, 0
        %v454 = vsel %vm440, %v432, 0
        %456 = vmatprep.subr.mxu0 %v448
        %457 = vmatpush1.xpose.msra.mxu0 %v427
        %458 = vmatprep.subr.mxu0 %v451
        %459 = vmatpush1.xpose.msra.mxu0 %v429
        %460 = vmatprep.subr.mxu0 %v454
        %461 = vmatpush1.xpose.msra.mxu0 %v431
        %462 = vmatprep.subr.mxu0 0.0
        %463 = vmatpush1.xpose.msra.mxu0 0.0
        %464 = vmatprep.subr.mxu0 0.0
        %465 = vmatpush1.xpose.msra.mxu0 0.0
        %466 = vmatprep.subr.mxu0 0.0
        %467 = vmatpush1.xpose.msra.mxu0 0.0
        %468 = vmatprep.subr.mxu0 0.0
        %469 = vmatpush1.xpose.msra.mxu0 0.0
        %470 = vmatprep.subr.mxu0 0.0
        %471 = vmatpush1.xpose.msra.mxu0 0.0
        %472 = vmatprep.subr.mxu0 0.0
        %473 = vmatpush1.xpose.msra.mxu0 0.0
        %474 = vmatprep.subr.mxu0 0.0
        %475 = vmatpush1.xpose.msra.mxu0 0.0
        %476 = vmatprep.subr.mxu0 0.0
        %477 = vmatpush1.xpose.msra.mxu0 0.0
        %478 = vmatprep.subr.mxu0 0.0
        %479 = vmatpush1.xpose.msra.mxu0 0.0
        %480 = vmatprep.subr.mxu0 0.0
        %481 = vmatpush1.xpose.msra.mxu0 0.0
        %482 = vmatprep.subr.mxu0 0.0
        %483 = vmatpush1.xpose.msra.mxu0 0.0
        %484 = vmatprep.subr.mxu0 0.0
        %485 = vmatpush1.xpose.msra.mxu0 0.0
        %486 = vmatprep.subr.mxu0 0.0
        %487 = vmatpush1.xpose.msra.mxu0 0.0
        %488 = vmatprep.subr.mxu0 0.0
        %489 = vmatpush1.xpose.msra.mxu0 0.0
        %490 = vmatprep.subr.mxu0 0.0
        %491 = vmatpush1.xpose.msra.mxu0 0.0
        %492 = vmatprep.subr.mxu0 0.0
        %493 = vmatpush1.xpose.msra.mxu0 0.0
        %494 = vmatprep.subr.mxu0 0.0
        %495 = vmatpush1.xpose.msra.mxu0 0.0
        %496 = vmatprep.subr.mxu0 0.0
        %497 = vmatpush1.xpose.msra.mxu0 0.0
        %498 = vmatprep.subr.mxu0 0.0
        %499 = vmatpush1.xpose.msra.mxu0 0.0
        %500 = vmatprep.subr.mxu0 0.0
        %501 = vmatpush1.xpose.msra.mxu0 0.0
        %502 = vmatprep.subr.mxu0 0.0
        %503 = vmatpush1.xpose.msra.mxu0 0.0
        %504 = vmatprep.subr.mxu0 0.0
        %505 = vmatpush1.xpose.msra.mxu0 0.0
        %506 = vmatprep.subr.mxu0 0.0
        %507 = vmatpush1.xpose.msra.mxu0 0.0
        %508 = vmatprep.subr.mxu0 0.0
        %509 = vmatpush1.xpose.msra.mxu0 0.0
        %510 = vmatprep.subr.mxu0 0.0
        %511 = vmatpush1.xpose.msra.mxu0 0.0
        %512 = vmatprep.subr.mxu0 0.0
        %513 = vmatpush1.xpose.msra.mxu0 0.0
        %514 = vmatprep.subr.mxu0 0.0
        %515 = vmatpush1.xpose.msra.mxu0 0.0
        %516 = vmatprep.subr.mxu0 0.0
        %517 = vmatpush1.xpose.msra.mxu0 0.0
        %518 = vmatprep.subr.mxu0 0.0
        %519 = vmatpush1.xpose.msra.mxu0 0.0
        %520 = vmatprep.mubr.f32.mxu0 %v442
        %521 = vmatmul.mubr.f32.gmra.mrb[0].mxu0 %v423
        %v522 = vpop.f32.mrb[0].mxu0
        %v523 = vadd.f32 %v438, %v522
        %v524 = vpop.f32.mrb[0].mxu0
        %525 = vmatprep.mubr.f32.mxu0 %v445
        %526 = vmatmul.mubr.f32.gmra.mrb[0].mxu0 %v425
        %v527 = vpop.f32.mrb[0].mxu0
        %v528 = vadd.f32 %v438, %v527
        %v529 = vpop.f32.mrb[0].mxu0
        %530 = vdwg.mxu0
        %v531 = vsub.f32 0.0, %v523
        %v532 = vsub.f32 0.0, %v528
        %v533 = vmul.f32 %v531, 1.442695
        %v534 = vpow.pop %v533
        %v535 = vmul.f32 %v532, 1.442695
        %v536 = vpow.pop %v535
        %v537 = vadd.f32 %v534, 1.0
        %v538 = vadd.f32 %v536, 1.0
        %v539 = vrcp.pop %v537
        %v540 = vmul.f32 1.0, %v539
        %v541 = vrcp.pop %v538
        %v542 = vmul.f32 1.0, %v541
        %v543 = vld [vmem:[%s3] sm:$0xff]
        %v544 = vld [vmem:[%s3 + $0x8] sm:$0xff]
        %v545 = vld [vmem:[%s3 + $0x10] sm:$0xf]
        %v546 = vld [vmem:[#allocation8] sm:$0x1]
        %v548 = vlaneseq
        %v549 = vshrl.u32 %v548, 7
        %v550 = vsub.s32 0, %v549
        %v551 = vrot.slane %v546, %v550
        %vm553 = vcmask 162816
        %v555 = vsel %vm553, %v540, 0
        %v558 = vsel %vm553, %v542, 0
        %vm560 = vcmask 1043456
        %v562 = vsel %vm560, %v545, 0
        %564 = vmatprep.subr.mxu0 0.0
        %565 = vmatpush1.msra.mxu0 %v543
        %566 = vmatprep.subr.mxu0 0.0
        %567 = vmatpush1.msra.mxu0 %v544
        %568 = vmatprep.subr.mxu0 0.0
        %569 = vmatpush1.msra.mxu0 %v562
        %570 = vmatprep.subr.mxu0 0.0
        %571 = vmatpush1.msra.mxu0 0.0
        %572 = vmatprep.subr.mxu0 0.0
        %573 = vmatpush1.msra.mxu0 0.0
        %574 = vmatprep.subr.mxu0 0.0
        %575 = vmatpush1.msra.mxu0 0.0
        %576 = vmatprep.subr.mxu0 0.0
        %577 = vmatpush1.msra.mxu0 0.0
        %578 = vmatprep.subr.mxu0 0.0
        %579 = vmatpush1.msra.mxu0 0.0
        %580 = vmatprep.subr.mxu0 0.0
        %581 = vmatpush1.msra.mxu0 0.0
        %582 = vmatprep.subr.mxu0 0.0
        %583 = vmatpush1.msra.mxu0 0.0
        %584 = vmatprep.subr.mxu0 0.0
        %585 = vmatpush1.msra.mxu0 0.0
        %586 = vmatprep.subr.mxu0 0.0
        %587 = vmatpush1.msra.mxu0 0.0
        %588 = vmatprep.subr.mxu0 0.0
        %589 = vmatpush1.msra.mxu0 0.0
        %590 = vmatprep.subr.mxu0 0.0
        %591 = vmatpush1.msra.mxu0 0.0
        %592 = vmatprep.subr.mxu0 0.0
        %593 = vmatpush1.msra.mxu0 0.0
        %594 = vmatprep.subr.mxu0 0.0
        %595 = vmatpush1.msra.mxu0 0.0
        %596 = vmatprep.subr.mxu0 0.0
        %597 = vmatpush1.msra.mxu0 0.0
        %598 = vmatprep.subr.mxu0 0.0
        %599 = vmatpush1.msra.mxu0 0.0
        %600 = vmatprep.subr.mxu0 0.0
        %601 = vmatpush1.msra.mxu0 0.0
        %602 = vmatprep.subr.mxu0 0.0
        %603 = vmatpush1.msra.mxu0 0.0
        %604 = vmatprep.subr.mxu0 0.0
        %605 = vmatpush1.msra.mxu0 0.0
        %606 = vmatprep.subr.mxu0 0.0
        %607 = vmatpush1.msra.mxu0 0.0
        %608 = vmatprep.subr.mxu0 0.0
        %609 = vmatpush1.msra.mxu0 0.0
        %610 = vmatprep.subr.mxu0 0.0
        %611 = vmatpush1.msra.mxu0 0.0
        %612 = vmatprep.subr.mxu0 0.0
        %613 = vmatpush1.msra.mxu0 0.0
        %614 = vmatprep.subr.mxu0 0.0
        %615 = vmatpush1.msra.mxu0 0.0
        %616 = vmatprep.subr.mxu0 0.0
        %617 = vmatpush1.msra.mxu0 0.0
        %618 = vmatprep.subr.mxu0 0.0
        %619 = vmatpush1.msra.mxu0 0.0
        %620 = vmatprep.subr.mxu0 0.0
        %621 = vmatpush1.msra.mxu0 0.0
        %622 = vmatprep.subr.mxu0 0.0
        %623 = vmatpush1.msra.mxu0 0.0
        %624 = vmatprep.subr.mxu0 0.0
        %625 = vmatpush1.msra.mxu0 0.0
        %626 = vmatprep.subr.mxu0 0.0
        %627 = vmatpush1.msra.mxu0 0.0
        %628 = vmatprep.mubr.f32.mxu0 0.0
        %629 = vmatmul.mubr.f32.gmra.mrb[0].mxu0 %v555
        %v630 = vpop.f32.mrb[0].mxu0
        %v631 = vadd.f32 %v551, %v630
        %v632 = vpop.f32.mrb[0].mxu0
        %633 = vmatprep.mubr.f32.mxu0 0.0
        %634 = vmatmul.mubr.f32.gmra.mrb[0].mxu0 %v558
        %v635 = vpop.f32.mrb[0].mxu0
        %v636 = vadd.f32 %v551, %v635
        %v637 = vpop.f32.mrb[0].mxu0
        %638 = vdwg.mxu0
        %v639 = vsub.f32 0.0, %v631
        %v640 = vsub.f32 0.0, %v636
        %v641 = vmul.f32 %v639, 1.442695
        %v642 = vpow.pop %v641
        %v643 = vmul.f32 %v640, 1.442695
        %v644 = vpow.pop %v643
        %v645 = vadd.f32 %v642, 1.0
        %v646 = vadd.f32 %v644, 1.0
        %v647 = vrcp.pop %v645
        %v648 = vmul.f32 1.0, %v647
        %v649 = vrcp.pop %v646
        %v650 = vmul.f32 1.0, %v649
        %v651 = vld [vmem:[%s5] sm:$0xff]
        %v652 = vld [vmem:[%s5 + $0x8] sm:$0x3]
        %v653 = vld [vmem:[#allocation10] sm:$0x1]
        %v655 = vlaneseq
        %v656 = vshrl.u32 %v655, 7
        %v657 = vsub.s32 0, %v656
        %v658 = vrot.slane %v653, %v657
        %vm660 = vcmask 80896
        %v662 = vsel %vm660, %v648, 0
        %v665 = vsel %vm660, %v650, 0
        %vm667 = vcmask 1041408
        %v669 = vsel %vm667, %v652, 0
        %671 = vmatprep.subr.mxu0 0.0
        %672 = vmatpush1.msra.mxu0 %v651
        %673 = vmatprep.subr.mxu0 0.0
        %674 = vmatpush1.msra.mxu0 %v669
        %675 = vmatprep.subr.mxu0 0.0
        %676 = vmatpush1.msra.mxu0 0.0
        %677 = vmatprep.subr.mxu0 0.0
        %678 = vmatpush1.msra.mxu0 0.0
        %679 = vmatprep.subr.mxu0 0.0
        %680 = vmatpush1.msra.mxu0 0.0
        %681 = vmatprep.subr.mxu0 0.0
        %682 = vmatpush1.msra.mxu0 0.0
        %683 = vmatprep.subr.mxu0 0.0
        %684 = vmatpush1.msra.mxu0 0.0
        %685 = vmatprep.subr.mxu0 0.0
        %686 = vmatpush1.msra.mxu0 0.0
        %687 = vmatprep.subr.mxu0 0.0
        %688 = vmatpush1.msra.mxu0 0.0
        %689 = vmatprep.subr.mxu0 0.0
        %690 = vmatpush1.msra.mxu0 0.0
        %691 = vmatprep.subr.mxu0 0.0
        %692 = vmatpush1.msra.mxu0 0.0
        %693 = vmatprep.subr.mxu0 0.0
        %694 = vmatpush1.msra.mxu0 0.0
        %695 = vmatprep.subr.mxu0 0.0
        %696 = vmatpush1.msra.mxu0 0.0
        %697 = vmatprep.subr.mxu0 0.0
        %698 = vmatpush1.msra.mxu0 0.0
        %699 = vmatprep.subr.mxu0 0.0
        %700 = vmatpush1.msra.mxu0 0.0
        %701 = vmatprep.subr.mxu0 0.0
        %702 = vmatpush1.msra.mxu0 0.0
        %703 = vmatprep.subr.mxu0 0.0
        %704 = vmatpush1.msra.mxu0 0.0
        %705 = vmatprep.subr.mxu0 0.0
        %706 = vmatpush1.msra.mxu0 0.0
        %707 = vmatprep.subr.mxu0 0.0
        %708 = vmatpush1.msra.mxu0 0.0
        %709 = vmatprep.subr.mxu0 0.0
        %710 = vmatpush1.msra.mxu0 0.0
        %711 = vmatprep.subr.mxu0 0.0
        %712 = vmatpush1.msra.mxu0 0.0
        %713 = vmatprep.subr.mxu0 0.0
        %714 = vmatpush1.msra.mxu0 0.0
        %715 = vmatprep.subr.mxu0 0.0
        %716 = vmatpush1.msra.mxu0 0.0
        %717 = vmatprep.subr.mxu0 0.0
        %718 = vmatpush1.msra.mxu0 0.0
        %719 = vmatprep.subr.mxu0 0.0
        %720 = vmatpush1.msra.mxu0 0.0
        %721 = vmatprep.subr.mxu0 0.0
        %722 = vmatpush1.msra.mxu0 0.0
        %723 = vmatprep.subr.mxu0 0.0
        %724 = vmatpush1.msra.mxu0 0.0
        %725 = vmatprep.subr.mxu0 0.0
        %726 = vmatpush1.msra.mxu0 0.0
        %727 = vmatprep.subr.mxu0 0.0
        %728 = vmatpush1.msra.mxu0 0.0
        %729 = vmatprep.subr.mxu0 0.0
        %730 = vmatpush1.msra.mxu0 0.0
        %731 = vmatprep.subr.mxu0 0.0
        %732 = vmatpush1.msra.mxu0 0.0
        %733 = vmatprep.subr.mxu0 0.0
        %734 = vmatpush1.msra.mxu0 0.0
        %735 = vmatprep.mubr.f32.mxu0 0.0
        %736 = vmatmul.mubr.f32.gmra.mrb[0].mxu0 %v662
        %v737 = vpop.f32.mrb[0].mxu0
        %v738 = vadd.f32 %v658, %v737
        %v739 = vpop.f32.mrb[0].mxu0
        %740 = vmatprep.mubr.f32.mxu0 0.0
        %741 = vmatmul.mubr.f32.gmra.mrb[0].mxu0 %v665
        %v742 = vpop.f32.mrb[0].mxu0
        %v743 = vadd.f32 %v658, %v742
        %v744 = vpop.f32.mrb[0].mxu0
        %745 = vdwg.mxu0
        %v746 = vsub.f32 0.0, %v738
        %v747 = vsub.f32 0.0, %v743
        %v748 = vmul.f32 %v746, 1.442695
        %v749 = vpow.pop %v748
        %v750 = vmul.f32 %v747, 1.442695
        %v751 = vpow.pop %v750
        %v752 = vadd.f32 %v749, 1.0
        %v753 = vadd.f32 %v751, 1.0
        %v754 = vrcp.pop %v752
        %v755 = vmul.f32 1.0, %v754
        %v756 = vrcp.pop %v753
        %v757 = vmul.f32 1.0, %v756
        %v758 = vld [vmem:[%s7] sm:$0xff]
        %v759 = vld [vmem:[%s7 + $0x8] sm:$0xff]
        %v760 = vld [vmem:[%s7 + $0x10] sm:$0xff]
        %v761 = vld [vmem:[%s7 + $0x18] sm:$0xff]
        %v762 = vld [vmem:[%s7 + $0x20] sm:$0xf]
        %v763 = vld [vmem:[%s7 + $0x28] sm:$0xf]
        %v764 = vld [vmem:[%s8] sm:$0x3]
        %v766 = vlaneseq
        %v767 = vshrl.u32 %v766, 7
        %v768 = vsub.s32 0, %v767
        %v769 = vrot.slane %v764, %v768
        %v770 = vlaneseq
        %v771 = vshrl.u32 %v770, 7
        %v772 = vsub.s32 1, %v771
        %v773 = vrot.slane %v764, %v772
        %v777 = vsel %vm553, %v755, 0
        %v780 = vsel %vm553, %v757, 0
        %v783 = vsel %vm560, %v762, 0
        %v786 = vsel %vm560, %v763, 0
        %788 = vmatprep.subr.mxu0 %v759
        %789 = vmatpush1.msra.mxu0 %v758
        %790 = vmatprep.subr.mxu0 %v761
        %791 = vmatpush1.msra.mxu0 %v760
        %792 = vmatprep.subr.mxu0 %v786
        %793 = vmatpush1.msra.mxu0 %v783
        %794 = vmatprep.subr.mxu0 0.0
        %795 = vmatpush1.msra.mxu0 0.0
        %796 = vmatprep.subr.mxu0 0.0
        %797 = vmatpush1.msra.mxu0 0.0
        %798 = vmatprep.subr.mxu0 0.0
        %799 = vmatpush1.msra.mxu0 0.0
        %800 = vmatprep.subr.mxu0 0.0
        %801 = vmatpush1.msra.mxu0 0.0
        %802 = vmatprep.subr.mxu0 0.0
        %803 = vmatpush1.msra.mxu0 0.0
        %804 = vmatprep.subr.mxu0 0.0
        %805 = vmatpush1.msra.mxu0 0.0
        %806 = vmatprep.subr.mxu0 0.0
        %807 = vmatpush1.msra.mxu0 0.0
        %808 = vmatprep.subr.mxu0 0.0
        %809 = vmatpush1.msra.mxu0 0.0
        %810 = vmatprep.subr.mxu0 0.0
        %811 = vmatpush1.msra.mxu0 0.0
        %812 = vmatprep.subr.mxu0 0.0
        %813 = vmatpush1.msra.mxu0 0.0
        %814 = vmatprep.subr.mxu0 0.0
        %815 = vmatpush1.msra.mxu0 0.0
        %816 = vmatprep.subr.mxu0 0.0
        %817 = vmatpush1.msra.mxu0 0.0
        %818 = vmatprep.subr.mxu0 0.0
        %819 = vmatpush1.msra.mxu0 0.0
        %820 = vmatprep.subr.mxu0 0.0
        %821 = vmatpush1.msra.mxu0 0.0
        %822 = vmatprep.subr.mxu0 0.0
        %823 = vmatpush1.msra.mxu0 0.0
        %824 = vmatprep.subr.mxu0 0.0
        %825 = vmatpush1.msra.mxu0 0.0
        %826 = vmatprep.subr.mxu0 0.0
        %827 = vmatpush1.msra.mxu0 0.0
        %828 = vmatprep.subr.mxu0 0.0
        %829 = vmatpush1.msra.mxu0 0.0
        %830 = vmatprep.subr.mxu0 0.0
        %831 = vmatpush1.msra.mxu0 0.0
        %832 = vmatprep.subr.mxu0 0.0
        %833 = vmatpush1.msra.mxu0 0.0
        %834 = vmatprep.subr.mxu0 0.0
        %835 = vmatpush1.msra.mxu0 0.0
        %836 = vmatprep.subr.mxu0 0.0
        %837 = vmatpush1.msra.mxu0 0.0
        %838 = vmatprep.subr.mxu0 0.0
        %839 = vmatpush1.msra.mxu0 0.0
        %840 = vmatprep.subr.mxu0 0.0
        %841 = vmatpush1.msra.mxu0 0.0
        %842 = vmatprep.subr.mxu0 0.0
        %843 = vmatpush1.msra.mxu0 0.0
        %844 = vmatprep.subr.mxu0 0.0
        %845 = vmatpush1.msra.mxu0 0.0
        %846 = vmatprep.subr.mxu0 0.0
        %847 = vmatpush1.msra.mxu0 0.0
        %848 = vmatprep.subr.mxu0 0.0
        %849 = vmatpush1.msra.mxu0 0.0
        %850 = vmatprep.subr.mxu0 0.0
        %851 = vmatpush1.msra.mxu0 0.0
        %852 = vmatprep.mubr.f32.mxu0 0.0
        %853 = vmatmul.mubr.f32.gmra.mrb[0].mxu0 %v777
        %v854 = vpop.f32.mrb[0].mxu0
        %v855 = vadd.f32 %v769, %v854
        %v856 = vpop.f32.mrb[0].mxu0
        %v857 = vadd.f32 %v773, %v856
        %858 = vmatprep.mubr.f32.mxu0 0.0
        %859 = vmatmul.mubr.f32.gmra.mrb[0].mxu0 %v780
        %v860 = vpop.f32.mrb[0].mxu0
        %v861 = vadd.f32 %v769, %v860
        %v862 = vpop.f32.mrb[0].mxu0
        %v863 = vadd.f32 %v773, %v862
        %864 = vdwg.mxu0
        %865 = vst [vmem:[%s410] sm:$0xff] %v855
        %866 = vst.msk [vmem:[%s410 + $0x8] sm:$0xff] %vm440, %v857
        %867 = vst [vmem:[%s410 + $0x10] sm:$0xff] %v861
        %868 = vst.msk [vmem:[%s410 + $0x18] sm:$0xff] %vm440, %v863
        %s869 = sand.u32 %s230, 1
        %s870 = scalar_lea.sflag [#allocation4], %s869
        %s871 = sand.u32 %s230, 1
        %s872 = smul.addr %s871, 32
        %s873 = scalar_lea.vmem [#allocation11], %s872
        // Predicated region
        $region77: #{tpu_custom_call.1} parent=55 // pred_check
          %p874 = pneg %p240
        $region78: #{tpu_custom_call.1} parent=55 // pred_check_branch
          %876 = sbr.rel (%p874) target = $region80
        $region79: #{tpu_custom_call.1} parent=55 // pred_region
          %s877 = smul.u32 2, %s28
          %s878 = ssub.s32 3, %s877
          %p879 = scmp.lt.s32.totalorder %s878, 2
          %s880 = scalar_select %p879, %s878, 2
          %s881 = smul.u32 128, %s880
          %s882 = smul.u32 %s881, 2
          %s884 = ssub.s32 512, %s882
          %885 = vsyncadd %s870, %s884
          %p886 = scmp.ne.s32.totalorder 0, %s882
          %s887 = smul.addr %s877, 2
          %s888 = smul.addr %s887, 128
          %s889 = scalar_lea.hbm %s9, %s888
          %s890 = smul.u32 16, %s880
          %s891 = sshll.u32 %s873, 4
          %s892 = int_to_ptr.vmem [resolvable:$true] %s891
          %s893 = sshll.u32 %s890, 4
          %897 = dma.vmem_to_hbm [thread:$0]  (%p886), %s892, %s893, %s889, %s870, 256, 256, 16
        $region80: #{tpu_custom_call.1} parent=55 // pred_fallthru
          _
      $region56: #{tpu_custom_call.1} parent=5 // pred_fallthru
        _
      %p898 = scmp.le.s32.totalorder 2, %s23
      // Predicated region
      $region81: #{tpu_custom_call.1} parent=5 // pred_check
        %p899 = pneg %p898
      $region82: #{tpu_custom_call.1} parent=5 // pred_check_branch
        %901 = sbr.rel (%p899) target = $region84
      $region83: #{tpu_custom_call.1} parent=5 // pred_region
        %s902 = ssub.s32 %s23, 2
        // Predicated region
        $region85: #{tpu_custom_call.1} parent=83 // pred_check
          %p903 = pneg %p246
        $region86: #{tpu_custom_call.1} parent=83 // pred_check_branch
          %905 = sbr.rel (%p903) target = $region88
        $region87: #{tpu_custom_call.1} parent=83 // pred_region
          %s906 = sand.u32 %s231, 1
          %s907 = scalar_lea.sflag [#allocation4], %s906
          %s908 = sand.u32 %s231, 1
          %s909 = smul.addr %s908, 32
          %s910 = scalar_lea.vmem [#allocation11], %s909
          %911 = dma.done %s907, 512
        $region88: #{tpu_custom_call.1} parent=83 // pred_fallthru
          _
      $region84: #{tpu_custom_call.1} parent=5 // pred_fallthru
        _
    $region6: #{tpu_custom_call.1} parent=1 // loop_footer
      %s27 = sadd.s32 1, %s23
    $region7: #{tpu_custom_call.1} parent=1 // loop_footer_branch
      %22 = sbr.rel target = $region3
    $region8: #{tpu_custom_call.1} parent=1 // loop_exit
      _
    %912 = vsyncpa [#allocation3], 1
    %s913 = scalar_lea.sflag [#allocation3], 1
    %914 = vsyncpa %s913, 1
    %915 = vsyncpa [#allocation6], 1
    %916 = vsyncpa [#allocation9], 1
    %917 = vsyncpa [#allocation4], 1
    %s918 = scalar_lea.sflag [#allocation4], 1
    %919 = vsyncpa %s918, 1

</llo_original>
